<compile_context>
chip_gen: v7x
topology: tpu7x:2x2x1
jax: 0.10.0
libtpu: 0.0.40
codegen_flags: <defaults>
</compile_context>

<pallas_src>
import functools

import jax
import jax.numpy as jnp
from jax.experimental import pallas as pl
from jax.experimental.pallas import tpu as pltpu


# ---------------------------------------------------------------------------
# Kernels
# ---------------------------------------------------------------------------

def _se_resident_kernel(x_ref, w1t_ref, w2t_ref, o_ref, *, inv_hw):
    """One (Bt, C, HW) batch block fully resident in VMEM."""
    # Global average pool as sum * (1/HW); exact (no padded tail exists).
    pooled = jnp.sum(x_ref[...].astype(jnp.float32), axis=-1) * inv_hw   # (Bt, C)

    # Excitation: two tiny batched matmuls (MXU) + ReLU + sigmoid.
    h = jnp.dot(pooled, w1t_ref[...], preferred_element_type=jnp.float32)
    h = jnp.maximum(h, 0.0)
    y = jnp.dot(h, w2t_ref[...], preferred_element_type=jnp.float32)
    y = jax.nn.sigmoid(y)                                                 # (Bt, C)

    # Channel-wise rescale.  Re-read x_ref here (instead of reusing a value
    # captured before the FC chain) so no multi-MiB value stays live across
    # the matmuls -> the multiply streams at the vld/vst slot rate.
    o_ref[...] = (x_ref[...] * y[:, :, None]).astype(o_ref.dtype)


def _se_pool_kernel(x_ref, pooled_ref, *, hw, hw_chunk, inv_hw):
    """Fallback pass 1: accumulate per-channel sums over HW chunks."""
    ci = pl.program_id(1)

    @pl.when(ci == 0)
    def _():
        pooled_ref[...] = jnp.zeros_like(pooled_ref)

    x = x_ref[...].astype(jnp.float32)                       # (1, C, hw_chunk)
    # Mask positions past the true HW: the last (partial) chunk is fetched
    # with unspecified values beyond the array bound.
    pos = ci * hw_chunk + jax.lax.broadcasted_iota(jnp.int32, x.shape, 2)
    x = jnp.where(pos < hw, x, 0.0)
    pooled_ref[...] += jnp.sum(x, axis=2, keepdims=True)     # (1, C, 1)

    @pl.when(ci == pl.num_programs(1) - 1)
    def _():
        pooled_ref[...] = pooled_ref[...] * inv_hw


def _se_rescale_kernel(x_ref, y_ref, o_ref):
    """Fallback pass 2: out = x * y, chunked over HW."""
    o_ref[...] = (x_ref[...] * y_ref[...]).astype(o_ref.dtype)


# ---------------------------------------------------------------------------
# Tiling / budget helpers
# ---------------------------------------------------------------------------

@functools.lru_cache(maxsize=1)
def _vmem_physical_bytes():
    """Physical VMEM of the local part; conservative (v7x) if unqueryable."""
    try:
        info = pltpu.get_tpu_info()
        v = int(getattr(info, "vmem_capacity_bytes", 0) or 0)
        if v > 0:
            return v
    except Exception:
        pass
    return 64 << 20   # v7x per-TC VMEM; safe lower bound on every generation


def _pick_batch_tile(B, row_bytes, block_budget_bytes):
    """Largest divisor Bt of B with Bt * row_bytes <= budget.

    Prefers an even number of grid steps (ideally >= 4) so v7x's two
    TensorCores split the "parallel" batch axis evenly; drops to a smaller Bt
    rather than accepting an odd step count when an even split exists.
    Returns None when even a single row exceeds the budget (caller takes the
    HW-chunked fallback path).
    """
    if row_bytes > block_budget_bytes:
        return None
    fits = [d for d in range(1, B + 1)
            if B % d == 0 and d * row_bytes <= block_budget_bytes]
    even4 = [d for d in fits if (B // d) % 2 == 0 and B // d >= 4]
    even2 = [d for d in fits if (B // d) % 2 == 0]
    multi = [d for d in fits if B // d >= 2]
    for group in (even4, even2, multi, fits):
        if group:
            return max(group)
    return 1


# ---------------------------------------------------------------------------
# Forward
# ---------------------------------------------------------------------------

@functools.partial(jax.jit, static_argnames=("block_budget_bytes",))
def se_forward(x_nchw, w1, w2, block_budget_bytes=None):
    """SE forward.  x_nchw: (B, C, H, W).  w1: (C//r, C).  w2: (C, C//r)."""
    B, C, H, W = x_nchw.shape
    HW = H * W
    Cr = w1.shape[0]
    itemsize = jnp.dtype(x_nchw.dtype).itemsize

    # No spatial padding: the (Bt, C, HW) block uses full-extent last dims.
    x = x_nchw.reshape(B, C, HW)
    w1t = w1.T                                   # (C, Cr)
    w2t = w2.T                                   # (Cr, C)
    w_bytes = int((w1.size + w2.size) * jnp.dtype(w1.dtype).itemsize)

    # Per-generation VMEM budget (~3/4 of physical, minus weights and slack,
    # divided by 4 buffers: double-buffered input + double-buffered output).
    vmem_cap = (_vmem_physical_bytes() * 3) // 4
    if block_budget_bytes is None:
        block_budget_bytes = max((vmem_cap - 4 * w_bytes - (2 << 20)) // 4, 1 << 20)

    row_bytes = C * HW * itemsize
    Bt = _pick_batch_tile(B, row_bytes, block_budget_bytes)

    if Bt is not None:
        # ----- Fast path: fully VMEM-resident (Bt, C, HW) batch blocks -----
        block_bytes = Bt * row_bytes
        vmem_limit = int(min(vmem_cap,
                             max(32 << 20, 4 * block_bytes + 4 * w_bytes + (2 << 20))))
        cost = pl.CostEstimate(
            flops=int(2 * B * C * HW + 4 * B * C * Cr),
            transcendentals=int(B * C),
            bytes_accessed=int(2 * B * C * HW * itemsize + 2 * w_bytes),
        )
        out = pl.pallas_call(
            functools.partial(_se_resident_kernel, inv_hw=1.0 / HW),
            out_shape=jax.ShapeDtypeStruct((B, C, HW), x.dtype),
            grid_spec=pltpu.PrefetchScalarGridSpec(
                num_scalar_prefetch=0,
                grid=(B // Bt,),
                in_specs=[
                    pl.BlockSpec((Bt, C, HW), lambda b: (b, 0, 0)),
                    pl.BlockSpec((C, Cr), lambda b: (0, 0)),
                    pl.BlockSpec((Cr, C), lambda b: (0, 0)),
                ],
                out_specs=pl.BlockSpec((Bt, C, HW), lambda b: (b, 0, 0)),
            ),
            compiler_params=pltpu.CompilerParams(
                dimension_semantics=("parallel",),
                vmem_limit_bytes=vmem_limit,
            ),
            cost_estimate=cost,
        )(x, w1t, w2t)
        return out.reshape(B, C, H, W)

    # ----- Fallback: a single (C, HW) row exceeds VMEM; chunk over HW. -----
    # Costs one extra HBM read of x (3x traffic floor when the row can't stay
    # resident).  Most relevant on v7x's 64 MiB per-TC VMEM.
    hw_chunk = max(((block_budget_bytes // (C * itemsize)) // 128) * 128, 128)
    hw_chunk = min(hw_chunk, ((HW + 127) // 128) * 128)
    n_chunks = pl.cdiv(HW, hw_chunk)
    chunk_bytes = C * hw_chunk * itemsize
    vmem_limit = int(min(vmem_cap, max(32 << 20, 4 * chunk_bytes + (4 << 20))))

    pooled = pl.pallas_call(
        functools.partial(_se_pool_kernel, hw=HW, hw_chunk=hw_chunk, inv_hw=1.0 / HW),
        out_shape=jax.ShapeDtypeStruct((B, C, 1), jnp.float32),
        grid_spec=pltpu.PrefetchScalarGridSpec(
            num_scalar_prefetch=0,
            grid=(B, n_chunks),
            in_specs=[pl.BlockSpec((1, C, hw_chunk), lambda b, c: (b, 0, c))],
            out_specs=pl.BlockSpec((1, C, 1), lambda b, c: (b, 0, 0)),
        ),
        compiler_params=pltpu.CompilerParams(
            dimension_semantics=("parallel", "arbitrary"),
            vmem_limit_bytes=vmem_limit,
        ),
    )(x)

    # Tiny excitation FCs on (B, C): negligible traffic/compute -> plain XLA.
    p = pooled[:, :, 0]                                       # (B, C) f32
    y = jax.nn.sigmoid(jnp.maximum(p @ w1t, 0.0) @ w2t)       # (B, C) f32
    y = y.astype(x.dtype)[:, :, None]                         # (B, C, 1)

    out = pl.pallas_call(
        _se_rescale_kernel,
        out_shape=jax.ShapeDtypeStruct((B, C, HW), x.dtype),
        grid_spec=pltpu.PrefetchScalarGridSpec(
            num_scalar_prefetch=0,
            grid=(B, n_chunks),
            in_specs=[
                pl.BlockSpec((1, C, hw_chunk), lambda b, c: (b, 0, c)),
                pl.BlockSpec((1, C, 1), lambda b, c: (b, 0, 0)),
            ],
            out_specs=pl.BlockSpec((1, C, hw_chunk), lambda b, c: (b, 0, c)),
        ),
        compiler_params=pltpu.CompilerParams(
            dimension_semantics=("parallel", "parallel"),
            vmem_limit_bytes=vmem_limit,
        ),
    )(x, y)
    return out.reshape(B, C, H, W)


# ---------------------------------------------------------------------------
# Reference + tests
# ---------------------------------------------------------------------------

def se_reference(x, w1, w2):
    y = jnp.mean(x, axis=(2, 3))                              # (B, C)
    y = jnp.maximum(y @ w1.T, 0.0)                            # (B, C//r)
    y = jax.nn.sigmoid(y @ w2.T)                              # (B, C)
    return x * y[:, :, None, None]


def _make_inputs(key, B, C, Cr, H, W):
    kx, k1, k2 = jax.random.split(key, 3)
    x = jax.random.normal(kx, (B, C, H, W), dtype=jnp.float32)
    # Deterministic Linear-style init (uniform +/- 1/sqrt(fan_in)), no bias.
    w1 = jax.random.uniform(k1, (Cr, C), jnp.float32,
                            minval=-1.0 / jnp.sqrt(C), maxval=1.0 / jnp.sqrt(C))
    w2 = jax.random.uniform(k2, (C, Cr), jnp.float32,
                            minval=-1.0 / jnp.sqrt(Cr), maxval=1.0 / jnp.sqrt(Cr))
    return x, w1, w2


if __name__ == "__main__":
    key = jax.random.PRNGKey(0)
    k_a, k_b = jax.random.split(key)

    # Case 1: dim=32, reduction=4 (Cr=8), HW already a multiple of 128.
    x1, w1a, w2a = _make_inputs(k_a, B=2, C=32, Cr=8, H=16, W=16)
    out1 = jax.block_until_ready(se_forward(x1, w1a, w2a))
    assert out1.shape == x1.shape
    assert jnp.allclose(out1, se_reference(x1, w1a, w2a), atol=1e-5, rtol=1e-5)

    # Case 2: HW=196 (not a multiple of 128), no wrapper pad/slice; B=4
    # exercises the even-step batch tiling for v7x.
    x2, w1b, w2b = _make_inputs(k_b, B=4, C=64, Cr=4, H=14, W=14)
    out2 = jax.block_until_ready(se_forward(x2, w1b, w2b))
    assert out2.shape == x2.shape
    assert jnp.allclose(out2, se_reference(x2, w1b, w2b), atol=1e-5, rtol=1e-5)

    # Case 3: force the oversize-row fallback (HW-chunked two-pass pipeline)
    # on the same small inputs by shrinking the per-block budget.
    out3 = jax.block_until_ready(
        se_forward(x2, w1b, w2b, block_budget_bytes=16 * 1024))
    assert out3.shape == x2.shape
    assert jnp.allclose(out3, se_reference(x2, w1b, w2b), atol=1e-5, rtol=1e-5)

    print("KERNEL_OK")
</pallas_src>

<mosaic_0001>
module attributes {stable_mosaic.version = 11 : i64} {
  func.func @_se_resident_kernel(%arg0: i32, %arg1: memref<1x32x256xf32, #tpu.memory_space<vmem>>, %arg2: memref<32x8xf32, #tpu.memory_space<vmem>>, %arg3: memref<8x32xf32, #tpu.memory_space<vmem>>, %arg4: memref<1x32x256xf32, #tpu.memory_space<vmem>>) attributes {dimension_semantics = [#tpu.dimension_semantics<parallel>], iteration_bounds = array<i64: 2>, scalar_prefetch = 0 : i64, scratch_operands = 0 : i64, tpu.core_type = #tpu.core_type<tc>, window_params = [{transform_indices = @transform_0, window_bounds = array<i64: 1, 32, 256>}, {pipeline_mode = #tpu.pipeline_mode<synchronous>, transform_indices = @transform_1, window_bounds = array<i64: 32, 8>}, {pipeline_mode = #tpu.pipeline_mode<synchronous>, transform_indices = @transform_2, window_bounds = array<i64: 8, 32>}, {transform_indices = @transform_3, window_bounds = array<i64: 1, 32, 256>}]} {
    %c0 = arith.constant 0 : index
    %c0_0 = arith.constant 0 : index
    %c0_1 = arith.constant 0 : index
    %0 = vector.load %arg1[%c0, %c0_0, %c0_1] : memref<1x32x256xf32, #tpu.memory_space<vmem>>, vector<1x32x256xf32>
    %cst = arith.constant dense<0.000000e+00> : vector<1x32xf32>
    %1 = vector.multi_reduction <add>, %0, %cst [2] : vector<1x32x256xf32> to vector<1x32xf32>
    %cst_2 = arith.constant 3.906250e-03 : f32
    %2 = vector.broadcast %cst_2 : f32 to vector<1x32xf32>
    %3 = arith.mulf %1, %2 : vector<1x32xf32>
    %c0_3 = arith.constant 0 : index
    %c0_4 = arith.constant 0 : index
    %4 = vector.load %arg2[%c0_3, %c0_4] : memref<32x8xf32, #tpu.memory_space<vmem>>, vector<32x8xf32>
    %cst_5 = arith.constant dense<0.000000e+00> : vector<1x8xf32>
    %5 = tpu.matmul %3, %4, %cst_5 {dimension_numbers = #tpu.dot_dimension_numbers<[1], [0], [0], [1], [0, 0, 1, 1], [], []>} : vector<1x32xf32>, vector<32x8xf32>, vector<1x8xf32> -> vector<1x8xf32>
    %cst_6 = arith.constant 0.000000e+00 : f32
    %6 = vector.broadcast %cst_6 : f32 to vector<1x8xf32>
    %7 = arith.maximumf %5, %6 : vector<1x8xf32>
    %c0_7 = arith.constant 0 : index
    %c0_8 = arith.constant 0 : index
    %8 = vector.load %arg3[%c0_7, %c0_8] : memref<8x32xf32, #tpu.memory_space<vmem>>, vector<8x32xf32>
    %cst_9 = arith.constant dense<0.000000e+00> : vector<1x32xf32>
    %9 = tpu.matmul %7, %8, %cst_9 {dimension_numbers = #tpu.dot_dimension_numbers<[1], [0], [0], [1], [0, 0, 1, 1], [], []>} : vector<1x8xf32>, vector<8x32xf32>, vector<1x32xf32> -> vector<1x32xf32>
    %10 = arith.negf %9 : vector<1x32xf32>
    %11 = math.exp %10 : vector<1x32xf32>
    %cst_10 = arith.constant 1.000000e+00 : f32
    %12 = vector.broadcast %cst_10 : f32 to vector<1x32xf32>
    %13 = arith.addf %12, %11 : vector<1x32xf32>
    %14 = arith.divf %12, %13 : vector<1x32xf32>
    %c0_11 = arith.constant 0 : index
    %c0_12 = arith.constant 0 : index
    %c0_13 = arith.constant 0 : index
    %15 = vector.load %arg1[%c0_11, %c0_12, %c0_13] : memref<1x32x256xf32, #tpu.memory_space<vmem>>, vector<1x32x256xf32>
    %16 = vector.shape_cast %14 : vector<1x32xf32> to vector<1x32x1xf32>
    %17 = vector.broadcast %16 : vector<1x32x1xf32> to vector<1x32x256xf32>
    %18 = arith.mulf %15, %17 : vector<1x32x256xf32>
    %c0_14 = arith.constant 0 : index
    %c0_15 = arith.constant 0 : index
    %c0_16 = arith.constant 0 : index
    %19 = vector.load %arg4[%c0_14, %c0_15, %c0_16] : memref<1x32x256xf32, #tpu.memory_space<vmem>>, vector<1x32x256xf32>
    tpu.vector_store %arg4[%c0_14, %c0_15, %c0_16], %18 {strides = array<i32>} : memref<1x32x256xf32, #tpu.memory_space<vmem>>, vector<1x32x256xf32>,
    return
  }
  func.func @transform_0(%arg0: i32) -> (i32, i32, i32) {
    %c0_i32 = arith.constant 0 : i32
    %c0_i32_0 = arith.constant 0 : i32
    %c0_i32_1 = arith.constant 0 : i32
    return %arg0, %c0_i32, %c0_i32_0 : i32, i32, i32
  }
  func.func @transform_1(%arg0: i32) -> (i32, i32) {
    %c0_i32 = arith.constant 0 : i32
    %c0_i32_0 = arith.constant 0 : i32
    %c0_i32_1 = arith.constant 0 : i32
    return %c0_i32, %c0_i32_0 : i32, i32
  }
  func.func @transform_2(%arg0: i32) -> (i32, i32) {
    %c0_i32 = arith.constant 0 : i32
    %c0_i32_0 = arith.constant 0 : i32
    %c0_i32_1 = arith.constant 0 : i32
    return %c0_i32, %c0_i32_0 : i32, i32
  }
  func.func @transform_3(%arg0: i32) -> (i32, i32, i32) {
    %c0_i32 = arith.constant 0 : i32
    %c0_i32_0 = arith.constant 0 : i32
    %c0_i32_1 = arith.constant 0 : i32
    return %arg0, %c0_i32, %c0_i32_0 : i32, i32, i32
  }
}

</mosaic_0001>

<llo_original>
// kernel: se_forward.1
$region0: #{se_forward.1}
  #allocation0 [shape = 'u32[]', space=smem, size = 0x4, offset = 0x4, fixed_abs, tag = 'smem constant byte address 0x4 - core index']
  #allocation1 [shape = 'u32[144,128]{1,0:T(1,128)}', space=vmem, size = 0x12000, scoped, tag = 'internal scratch']
  %s0 = inlined_call_operand.vmem [shape: f32[2,32,256], index: 0, kind: input, shape index: {}]
  %s1 = inlined_call_operand.vmem [shape: f32[32,8], index: 1, kind: input, shape index: {}]
  %s2 = inlined_call_operand.vmem [shape: f32[8,32], index: 2, kind: input, shape index: {}]
  %s3 = inlined_call_operand.vmem [shape: f32[2,32,256], index: 3, kind: output, shape index: {}]
  %s4 = sld [smem:[#allocation0]]
  $region45: #{se_forward.1} parent=0
    _
  %s6 = ssub.s32 1, %s4
  %s7 = scalar_select 0, %s6, %s4
  loop: start=0, step=1, limit=4
  $region2: #{se_forward.1} parent=0 // loop_pre_header
    _
  $region3: #{se_forward.1} parent=0 // loop_header
    %s9 = sphi 0, %s13
    %p10 = scmp.ge.s32.totalorder %s9, 4
    %s19 = sphi 0, %s21
    %s22 = sphi 0, %s19
    %s23 = sphi 0, %s22
    %s39 = sphi 0, %s23
    %s43 = sphi 0, %s43
    %s45 = sphi 0, %s43
    %s46 = sphi 0, %s45
    %s60 = sphi 0, %s46
    %s64 = sphi 0, %s64
    %s66 = sphi 0, %s64
    %s67 = sphi 0, %s66
    %s81 = sphi 0, %s67
    %s87 = sphi 0, %s89
    %s90 = sphi 0, %s87
    %s91 = sphi 0, %s90
    %s107 = sphi 0, %s91
  $region4: #{se_forward.1} parent=0 // loop_header_branch
    %12 = sbr.rel (%p10) target = $region8
  $region5: #{se_forward.1} parent=0 // loop_body
    %s14 = ssub.s32 %s9, 1
    %s15 = ssub.s32 %s9, 2
    %s16 = sadd.s32 %s9, 1
    %s17 = ssub.s32 %s9, %s16
    %p18 = scmp.eq.s32.totalorder %s17, 0
    %s20 = sadd.s32 %s19, 1
    %s21 = scalar_select %p18, %s19, %s20
    %p24 = pneg %p18
    %p25 = scmp.eq.s32.totalorder %s9, 1
    %p26 = por %p24, %p25
    %p27 = scmp.ne.s32.totalorder %s19, %s22
    %p28 = scmp.eq.s32.totalorder %s9, 0
    %p29 = por %p27, %p28
    %p30 = scmp.ne.s32.totalorder %s19, %s22
    %p31 = scmp.eq.s32.totalorder %s14, 1
    %p32 = por %p30, %p31
    %p33 = scmp.ne.s32.totalorder %s22, %s23
    %p34 = scmp.eq.s32.totalorder %s14, 0
    %p35 = por %p33, %p34
    %p36 = scmp.ne.s32.totalorder %s22, %s23
    %p37 = scmp.eq.s32.totalorder %s15, 1
    %p38 = por %p36, %p37
    %p40 = scmp.ne.s32.totalorder %s23, %s39
    %p41 = scmp.eq.s32.totalorder %s15, 0
    %p42 = por %p40, %p41
    %s44 = sadd.s32 %s43, 1
    %p47 = scmp.eq.s32.totalorder %s9, 1
    %p48 = scmp.ne.s32.totalorder %s43, %s45
    %p49 = scmp.eq.s32.totalorder %s9, 0
    %p50 = por %p48, %p49
    %p51 = scmp.ne.s32.totalorder %s43, %s45
    %p52 = scmp.eq.s32.totalorder %s14, 1
    %p53 = por %p51, %p52
    %p54 = scmp.ne.s32.totalorder %s45, %s46
    %p55 = scmp.eq.s32.totalorder %s14, 0
    %p56 = por %p54, %p55
    %p57 = scmp.ne.s32.totalorder %s45, %s46
    %p58 = scmp.eq.s32.totalorder %s15, 1
    %p59 = por %p57, %p58
    %p61 = scmp.ne.s32.totalorder %s46, %s60
    %p62 = scmp.eq.s32.totalorder %s15, 0
    %p63 = por %p61, %p62
    %s65 = sadd.s32 %s64, 1
    %p68 = scmp.eq.s32.totalorder %s9, 1
    %p69 = scmp.ne.s32.totalorder %s64, %s66
    %p70 = scmp.eq.s32.totalorder %s9, 0
    %p71 = por %p69, %p70
    %p72 = scmp.ne.s32.totalorder %s64, %s66
    %p73 = scmp.eq.s32.totalorder %s14, 1
    %p74 = por %p72, %p73
    %p75 = scmp.ne.s32.totalorder %s66, %s67
    %p76 = scmp.eq.s32.totalorder %s14, 0
    %p77 = por %p75, %p76
    %p78 = scmp.ne.s32.totalorder %s66, %s67
    %p79 = scmp.eq.s32.totalorder %s15, 1
    %p80 = por %p78, %p79
    %p82 = scmp.ne.s32.totalorder %s67, %s81
    %p83 = scmp.eq.s32.totalorder %s15, 0
    %p84 = por %p82, %p83
    %s85 = ssub.s32 %s9, %s16
    %p86 = scmp.eq.s32.totalorder %s85, 0
    %s88 = sadd.s32 %s87, 1
    %s89 = scalar_select %p86, %s87, %s88
    %p92 = pneg %p86
    %p93 = scmp.eq.s32.totalorder %s9, 1
    %p94 = por %p92, %p93
    %p95 = scmp.ne.s32.totalorder %s87, %s90
    %p96 = scmp.eq.s32.totalorder %s9, 0
    %p97 = por %p95, %p96
    %p98 = scmp.ne.s32.totalorder %s87, %s90
    %p99 = scmp.eq.s32.totalorder %s14, 1
    %p100 = por %p98, %p99
    %p101 = scmp.ne.s32.totalorder %s90, %s91
    %p102 = scmp.eq.s32.totalorder %s14, 0
    %p103 = por %p101, %p102
    %p104 = scmp.ne.s32.totalorder %s90, %s91
    %p105 = scmp.eq.s32.totalorder %s15, 1
    %p106 = por %p104, %p105
    %p108 = scmp.ne.s32.totalorder %s91, %s107
    %p109 = scmp.eq.s32.totalorder %s15, 0
    %p110 = por %p108, %p109
    %p111 = scmp.le.s32.totalorder 1, %s9
    %p112 = scmp.lt.s32.totalorder %s9, 3
    %p113 = pnand %p111, %p112
    %p114 = pneg %p113
    // Predicated region
    $region9: #{se_forward.1} parent=5 // pred_check
      _
    $region10: #{se_forward.1} parent=5 // pred_check_branch
      %116 = sbr.rel (%p113) target = $region12
    $region11: #{se_forward.1} parent=5 // pred_region
      %s117 = ssub.s32 %s9, 1
      // Predicated region
      $region13: #{se_forward.1} parent=11 // pred_check
        %p118 = pneg %p56
      $region14: #{se_forward.1} parent=11 // pred_check_branch
        %120 = sbr.rel (%p118) target = $region16
      $region15: #{se_forward.1} parent=11 // pred_region
        _
      $region16: #{se_forward.1} parent=11 // pred_fallthru
        _
      // Predicated region
      $region17: #{se_forward.1} parent=11 // pred_check
        %p121 = pneg %p77
      $region18: #{se_forward.1} parent=11 // pred_check_branch
        %123 = sbr.rel (%p121) target = $region20
      $region19: #{se_forward.1} parent=11 // pred_region
        _
      $region20: #{se_forward.1} parent=11 // pred_fallthru
        _
    $region12: #{se_forward.1} parent=5 // pred_fallthru
      _
    %p124 = scmp.lt.s32.totalorder %s9, 2
    // Predicated region
    $region21: #{se_forward.1} parent=5 // pred_check
      %p125 = pneg %p124
    $region22: #{se_forward.1} parent=5 // pred_check_branch
      %127 = sbr.rel (%p125) target = $region24
    $region23: #{se_forward.1} parent=5 // pred_region
      // Predicated region
      $region25: #{se_forward.1} parent=23 // pred_check
        %p128 = pneg %p29
      $region26: #{se_forward.1} parent=23 // pred_check_branch
        %130 = sbr.rel (%p128) target = $region28
      $region27: #{se_forward.1} parent=23 // pred_region
        %p131 = scmp.lt.s32.totalorder %s9, 1
        %s132 = scalar_select %p131, %s9, 1
        %s133 = smul.addr %s132, 8
        %s134 = smul.addr %s133, 8
        %s135 = scalar_lea.vmem %s0, %s134
      $region28: #{se_forward.1} parent=23 // pred_fallthru
        _
    $region24: #{se_forward.1} parent=5 // pred_fallthru
      _
    %p136 = scmp.le.s32.totalorder 1, %s9
    %p137 = scmp.lt.s32.totalorder %s9, 3
    %p138 = pnand %p136, %p137
    %p139 = pneg %p138
    // Predicated region
    $region29: #{se_forward.1} parent=5 // pred_check
      _
    $region30: #{se_forward.1} parent=5 // pred_check_branch
      %141 = sbr.rel (%p138) target = $region32
    $region31: #{se_forward.1} parent=5 // pred_region
      %s142 = ssub.s32 %s9, 1
      %p143 = scmp.lt.s32.totalorder %s14, 1
      %s144 = scalar_select %p143, %s14, 1
      %s145 = smul.addr %s144, 8
      %s146 = smul.addr %s145, 8
      %s147 = scalar_lea.vmem %s0, %s146
      %p148 = pneg %p35
      %p149 = pneg %p32
      %p150 = pneg %p56
      %p151 = pneg %p53
      %p152 = pneg %p77
      %p153 = pneg %p74
      %p154 = pneg %p103
      %p155 = pneg %p100
      %p156 = scmp.lt.s32.totalorder %s14, 1
      %s157 = scalar_select %p156, %s14, 1
      %s158 = smul.addr %s157, 8
      %s159 = smul.addr %s158, 8
      %s160 = scalar_lea.vmem %s3, %s159
      %p161 = scmp.lt.s32.totalorder %s14, 1
      %s162 = scalar_select %p161, %s14, 1
      %s163 = smul.addr %s162, 8
      %s164 = smul.addr %s163, 8
      %s165 = scalar_lea.vmem %s0, %s164
      %p166 = scmp.lt.s32.totalorder %s14, 1
      %s167 = scalar_select %p166, %s14, 1
      %s168 = smul.addr %s167, 8
      %s169 = smul.addr %s168, 8
      %s170 = scalar_lea.vmem %s3, %s169
      %v171 = vld [vmem:[%s165] sm:$0xff]
      %v172 = vld [vmem:[%s165 + $0x8] sm:$0xff]
      %v173 = vld [vmem:[%s165 + $0x10] sm:$0xff]
      %v174 = vld [vmem:[%s165 + $0x18] sm:$0xff]
      %v175 = vld [vmem:[%s165 + $0x20] sm:$0xff]
      %v176 = vld [vmem:[%s165 + $0x28] sm:$0xff]
      %v177 = vld [vmem:[%s165 + $0x30] sm:$0xff]
      %v178 = vld [vmem:[%s165 + $0x38] sm:$0xff]
      %v179 = vadd.f32 %v171, %v172
      %180 = vadd.xlane.f32.xlu0 %v179
      %v181 = vpop.xlane.xlu0 %180
      %v182 = vadd.f32 %v173, %v174
      %183 = vadd.xlane.f32.xlu0 %v182
      %v184 = vpop.xlane.xlu0 %183
      %v185 = vadd.f32 %v175, %v176
      %186 = vadd.xlane.f32.xlu0 %v185
      %v187 = vpop.xlane.xlu0 %186
      %v188 = vadd.f32 %v177, %v178
      %189 = vadd.xlane.f32.xlu0 %v188
      %v190 = vpop.xlane.xlu0 %189
      %v191 = vmul.f32 %v181, 0.00390625
      %v192 = vmul.f32 %v184, 0.00390625
      %v193 = vmul.f32 %v187, 0.00390625
      %v194 = vmul.f32 %v190, 0.00390625
      %v195 = vld [vmem:[%s1] sm:$0xff]
      %v196 = vld [vmem:[%s1 + $0x8] sm:$0xff]
      %v197 = vld [vmem:[%s1 + $0x10] sm:$0xff]
      %v198 = vld [vmem:[%s1 + $0x18] sm:$0xff]
      %v203 = vlaneseq
      %v204 = vand.u32 %v203, 127
      %v205 = vlaneseq
      %v206 = vshrl.u32 %v205, 7
      %v207 = vsub.s32 %v204, %v206
      %v208 = vrot.slane %v191, %v207
      %v209 = vadd.s32 %v204, 4294967288
      %v210 = vlaneseq
      %v211 = vshrl.u32 %v210, 7
      %v212 = vsub.s32 %v209, %v211
      %v213 = vrot.slane %v192, %v212
      %vm214 = vcmask 130112
      %v215 = vsel %vm214, %v213, %v208
      %v216 = vadd.s32 %v204, 4294967280
      %v217 = vlaneseq
      %v218 = vshrl.u32 %v217, 7
      %v219 = vsub.s32 %v216, %v218
      %v220 = vrot.slane %v193, %v219
      %vm221 = vcmask 195712
      %v222 = vsel %vm221, %v220, %v215
      %v223 = vadd.s32 %v204, 4294967272
      %v224 = vlaneseq
      %v225 = vshrl.u32 %v224, 7
      %v226 = vsub.s32 %v223, %v225
      %v227 = vrot.slane %v194, %v226
      %vm228 = vcmask 261312
      %v229 = vsel %vm228, %v227, %v222
      %vm230 = vcmask 261120
      %v231 = vsel %vm230, %v229, 0
      %233 = vmatprep.subr.mxu0 0.0
      %234 = vmatpush1.msra.mxu0 %v195
      %235 = vmatprep.subr.mxu0 0.0
      %236 = vmatpush1.msra.mxu0 %v196
      %237 = vmatprep.subr.mxu0 0.0
      %238 = vmatpush1.msra.mxu0 %v197
      %239 = vmatprep.subr.mxu0 0.0
      %240 = vmatpush1.msra.mxu0 %v198
      %241 = vmatprep.subr.mxu0 0.0
      %242 = vmatpush1.msra.mxu0 0.0
      %243 = vmatprep.subr.mxu0 0.0
      %244 = vmatpush1.msra.mxu0 0.0
      %245 = vmatprep.subr.mxu0 0.0
      %246 = vmatpush1.msra.mxu0 0.0
      %247 = vmatprep.subr.mxu0 0.0
      %248 = vmatpush1.msra.mxu0 0.0
      %249 = vmatprep.subr.mxu0 0.0
      %250 = vmatpush1.msra.mxu0 0.0
      %251 = vmatprep.subr.mxu0 0.0
      %252 = vmatpush1.msra.mxu0 0.0
      %253 = vmatprep.subr.mxu0 0.0
      %254 = vmatpush1.msra.mxu0 0.0
      %255 = vmatprep.subr.mxu0 0.0
      %256 = vmatpush1.msra.mxu0 0.0
      %257 = vmatprep.subr.mxu0 0.0
      %258 = vmatpush1.msra.mxu0 0.0
      %259 = vmatprep.subr.mxu0 0.0
      %260 = vmatpush1.msra.mxu0 0.0
      %261 = vmatprep.subr.mxu0 0.0
      %262 = vmatpush1.msra.mxu0 0.0
      %263 = vmatprep.subr.mxu0 0.0
      %264 = vmatpush1.msra.mxu0 0.0
      %265 = vmatprep.subr.mxu0 0.0
      %266 = vmatpush1.msra.mxu0 0.0
      %267 = vmatprep.subr.mxu0 0.0
      %268 = vmatpush1.msra.mxu0 0.0
      %269 = vmatprep.subr.mxu0 0.0
      %270 = vmatpush1.msra.mxu0 0.0
      %271 = vmatprep.subr.mxu0 0.0
      %272 = vmatpush1.msra.mxu0 0.0
      %273 = vmatprep.subr.mxu0 0.0
      %274 = vmatpush1.msra.mxu0 0.0
      %275 = vmatprep.subr.mxu0 0.0
      %276 = vmatpush1.msra.mxu0 0.0
      %277 = vmatprep.subr.mxu0 0.0
      %278 = vmatpush1.msra.mxu0 0.0
      %279 = vmatprep.subr.mxu0 0.0
      %280 = vmatpush1.msra.mxu0 0.0
      %281 = vmatprep.subr.mxu0 0.0
      %282 = vmatpush1.msra.mxu0 0.0
      %283 = vmatprep.subr.mxu0 0.0
      %284 = vmatpush1.msra.mxu0 0.0
      %285 = vmatprep.subr.mxu0 0.0
      %286 = vmatpush1.msra.mxu0 0.0
      %287 = vmatprep.subr.mxu0 0.0
      %288 = vmatpush1.msra.mxu0 0.0
      %289 = vmatprep.subr.mxu0 0.0
      %290 = vmatpush1.msra.mxu0 0.0
      %291 = vmatprep.subr.mxu0 0.0
      %292 = vmatpush1.msra.mxu0 0.0
      %293 = vmatprep.subr.mxu0 0.0
      %294 = vmatpush1.msra.mxu0 0.0
      %295 = vmatprep.subr.mxu0 0.0
      %296 = vmatpush1.msra.mxu0 0.0
      %297 = vmatprep.mubr.f32.mxu0 0.0
      %298 = vmatmul.mubr.f32.gmra.mrb[0].mxu0 %v231
      %v299 = vpop.f32.mrb[0].mxu0
      %v300 = vadd.f32 0.0, %v299
      %v301 = vpop.f32.mrb[0].mxu0
      %302 = vdwg.mxu0
      %v303 = vmax.f32 %v300, 0.0
      %v304 = vld [vmem:[%s2] sm:$0xff]
      %vm305 = vcmask 64512
      %v307 = vsel %vm305, %v303, 0
      %309 = vmatprep.subr.mxu0 0.0
      %310 = vmatpush1.msra.mxu0 %v304
      %311 = vmatprep.subr.mxu0 0.0
      %312 = vmatpush1.msra.mxu0 0.0
      %313 = vmatprep.subr.mxu0 0.0
      %314 = vmatpush1.msra.mxu0 0.0
      %315 = vmatprep.subr.mxu0 0.0
      %316 = vmatpush1.msra.mxu0 0.0
      %317 = vmatprep.subr.mxu0 0.0
      %318 = vmatpush1.msra.mxu0 0.0
      %319 = vmatprep.subr.mxu0 0.0
      %320 = vmatpush1.msra.mxu0 0.0
      %321 = vmatprep.subr.mxu0 0.0
      %322 = vmatpush1.msra.mxu0 0.0
      %323 = vmatprep.subr.mxu0 0.0
      %324 = vmatpush1.msra.mxu0 0.0
      %325 = vmatprep.subr.mxu0 0.0
      %326 = vmatpush1.msra.mxu0 0.0
      %327 = vmatprep.subr.mxu0 0.0
      %328 = vmatpush1.msra.mxu0 0.0
      %329 = vmatprep.subr.mxu0 0.0
      %330 = vmatpush1.msra.mxu0 0.0
      %331 = vmatprep.subr.mxu0 0.0
      %332 = vmatpush1.msra.mxu0 0.0
      %333 = vmatprep.subr.mxu0 0.0
      %334 = vmatpush1.msra.mxu0 0.0
      %335 = vmatprep.subr.mxu0 0.0
      %336 = vmatpush1.msra.mxu0 0.0
      %337 = vmatprep.subr.mxu0 0.0
      %338 = vmatpush1.msra.mxu0 0.0
      %339 = vmatprep.subr.mxu0 0.0
      %340 = vmatpush1.msra.mxu0 0.0
      %341 = vmatprep.subr.mxu0 0.0
      %342 = vmatpush1.msra.mxu0 0.0
      %343 = vmatprep.subr.mxu0 0.0
      %344 = vmatpush1.msra.mxu0 0.0
      %345 = vmatprep.subr.mxu0 0.0
      %346 = vmatpush1.msra.mxu0 0.0
      %347 = vmatprep.subr.mxu0 0.0
      %348 = vmatpush1.msra.mxu0 0.0
      %349 = vmatprep.subr.mxu0 0.0
      %350 = vmatpush1.msra.mxu0 0.0
      %351 = vmatprep.subr.mxu0 0.0
      %352 = vmatpush1.msra.mxu0 0.0
      %353 = vmatprep.subr.mxu0 0.0
      %354 = vmatpush1.msra.mxu0 0.0
      %355 = vmatprep.subr.mxu0 0.0
      %356 = vmatpush1.msra.mxu0 0.0
      %357 = vmatprep.subr.mxu0 0.0
      %358 = vmatpush1.msra.mxu0 0.0
      %359 = vmatprep.subr.mxu0 0.0
      %360 = vmatpush1.msra.mxu0 0.0
      %361 = vmatprep.subr.mxu0 0.0
      %362 = vmatpush1.msra.mxu0 0.0
      %363 = vmatprep.subr.mxu0 0.0
      %364 = vmatpush1.msra.mxu0 0.0
      %365 = vmatprep.subr.mxu0 0.0
      %366 = vmatpush1.msra.mxu0 0.0
      %367 = vmatprep.subr.mxu0 0.0
      %368 = vmatpush1.msra.mxu0 0.0
      %369 = vmatprep.subr.mxu0 0.0
      %370 = vmatpush1.msra.mxu0 0.0
      %371 = vmatprep.subr.mxu0 0.0
      %372 = vmatpush1.msra.mxu0 0.0
      %373 = vmatprep.mubr.f32.mxu0 0.0
      %374 = vmatmul.mubr.f32.gmra.mrb[0].mxu0 %v307
      %v375 = vpop.f32.mrb[0].mxu0
      %v376 = vadd.f32 0.0, %v375
      %v377 = vpop.f32.mrb[0].mxu0
      %378 = vdwg.mxu0
      %v379 = vxor.u32 %v376, 2147483648
      %v380 = vmul.f32 %v379, 1.442695
      %v381 = vpow.pop %v380
      %v382 = vadd.f32 %v381, 1.0
      %v383 = vrcp.pop %v382
      %v384 = vmul.f32 1.0, %v383
      %v385 = vlaneseq
      %v386 = vshrl.u32 %v385, 7
      %v387 = vsub.s32 0, %v386
      %v388 = vrot.slane %v384, %v387
      %390 = vbcast.lane.b32.xlu0 %v388, 256
      %v391 = vpop.permute.xlu0 %390
      %s393 = sor.u32 256, 8
      %394 = vbcast.lane.b32.xlu0 %v388, %s393
      %v395 = vpop.permute.xlu0 %394
      %s397 = sor.u32 256, 16
      %398 = vbcast.lane.b32.xlu0 %v388, %s397
      %v399 = vpop.permute.xlu0 %398
      %s401 = sor.u32 256, 24
      %402 = vbcast.lane.b32.xlu0 %v388, %s401
      %v403 = vpop.permute.xlu0 %402
      %v404 = vmul.f32 %v171, %v391
      %v405 = vmul.f32 %v172, %v391
      %v406 = vmul.f32 %v173, %v395
      %v407 = vmul.f32 %v174, %v395
      %v408 = vmul.f32 %v175, %v399
      %v409 = vmul.f32 %v176, %v399
      %v410 = vmul.f32 %v177, %v403
      %v411 = vmul.f32 %v178, %v403
      %412 = vst [vmem:[%s170] sm:$0xff] %v404
      %413 = vst [vmem:[%s170 + $0x8] sm:$0xff] %v405
      %414 = vst [vmem:[%s170 + $0x10] sm:$0xff] %v406
      %415 = vst [vmem:[%s170 + $0x18] sm:$0xff] %v407
      %416 = vst [vmem:[%s170 + $0x20] sm:$0xff] %v408
      %417 = vst [vmem:[%s170 + $0x28] sm:$0xff] %v409
      %418 = vst [vmem:[%s170 + $0x30] sm:$0xff] %v410
      %419 = vst [vmem:[%s170 + $0x38] sm:$0xff] %v411
      %p420 = scmp.lt.s32.totalorder %s14, 1
      %s421 = scalar_select %p420, %s14, 1
      %s422 = smul.addr %s421, 8
      %s423 = smul.addr %s422, 8
      %s424 = scalar_lea.vmem %s3, %s423
      // Predicated region
      $region33: #{se_forward.1} parent=31 // pred_check
        %p425 = pneg %p100
      $region34: #{se_forward.1} parent=31 // pred_check_branch
        %427 = sbr.rel (%p425) target = $region36
      $region35: #{se_forward.1} parent=31 // pred_region
        _
      $region36: #{se_forward.1} parent=31 // pred_fallthru
        _
    $region32: #{se_forward.1} parent=5 // pred_fallthru
      _
    %p428 = scmp.le.s32.totalorder 2, %s9
    // Predicated region
    $region37: #{se_forward.1} parent=5 // pred_check
      %p429 = pneg %p428
    $region38: #{se_forward.1} parent=5 // pred_check_branch
      %431 = sbr.rel (%p429) target = $region40
    $region39: #{se_forward.1} parent=5 // pred_region
      %s432 = ssub.s32 %s9, 2
      // Predicated region
      $region41: #{se_forward.1} parent=39 // pred_check
        %p433 = pneg %p106
      $region42: #{se_forward.1} parent=39 // pred_check_branch
        %435 = sbr.rel (%p433) target = $region44
      $region43: #{se_forward.1} parent=39 // pred_region
        %p436 = scmp.lt.s32.totalorder %s15, 1
        %s437 = scalar_select %p436, %s15, 1
        %s438 = smul.addr %s437, 8
        %s439 = smul.addr %s438, 8
        %s440 = scalar_lea.vmem %s3, %s439
      $region44: #{se_forward.1} parent=39 // pred_fallthru
        _
    $region40: #{se_forward.1} parent=5 // pred_fallthru
      _
  $region6: #{se_forward.1} parent=0 // loop_footer
    %s13 = sadd.s32 1, %s9
  $region7: #{se_forward.1} parent=0 // loop_footer_branch
    %8 = sbr.rel target = $region3
  $region8: #{se_forward.1} parent=0 // loop_exit
    _

</llo_original>
